<compile_context>
chip_gen: v7x
topology: tpu7x:2x2x1
jax: 0.10.0
libtpu: 0.0.40
codegen_flags: <defaults>
</compile_context>

<pallas_src>
import jax
import jax.numpy as jnp
from jax.experimental import pallas as pl
from jax.experimental.pallas import tpu as pltpu


_LANE = 128  # lane tile (last dim) — keep the fused output lane-dense


def _round_up(n, m):
    return ((n + m - 1) // m) * m


def _fused_linear_kernel(x_ref, w_ref, b_ref, o_ref):
    # x_ref: (B, C)  w_ref: (C, Op)  b_ref: (1, Op)  o_ref: (B, Op)   (all f32)
    o_ref[...] = (
        jnp.dot(x_ref[...], w_ref[...], preferred_element_type=jnp.float32)
        + b_ref[...]
    )


def fused_linear(x, w_all, b_all):
    """x: (B, C) f32; w_all: (C, Op) f32; b_all: (1, Op) f32 -> (B, Op) f32.

    Op must be a multiple of 128 (caller pads the weights once at init).
    B may be anything: full-array VMEM specs are exempt from the (8,128)
    divisibility rule, and the sublane-masked load of one vreg is free.
    Grid-less call: whole problem lives in VMEM, single MXU pass.
    """
    B, C = x.shape
    Op = w_all.shape[1]
    cost = pl.CostEstimate(
        flops=2 * B * C * Op,
        transcendentals=0,
        bytes_accessed=4 * (B * C + C * Op + Op + B * Op),
    )
    return pl.pallas_call(
        _fused_linear_kernel,
        out_shape=jax.ShapeDtypeStruct((B, Op), jnp.float32),
        in_specs=[
            pl.BlockSpec(memory_space=pltpu.MemorySpace.VMEM),
            pl.BlockSpec(memory_space=pltpu.MemorySpace.VMEM),
            pl.BlockSpec(memory_space=pltpu.MemorySpace.VMEM),
        ],
        out_specs=pl.BlockSpec(memory_space=pltpu.MemorySpace.VMEM),
        cost_estimate=cost,
        compiler_params=pltpu.CompilerParams(
            # Let XLA fuse the producer-side reshape of x into this call
            # instead of materializing the (B, C) intermediate.
            allow_input_fusion=[True, False, False],
        ),
    )(x, w_all, b_all)


def _make_forward(layer_specs, o_total):
    """Build a single jitted forward: reshape -> fused matmul -> split."""

    @jax.jit
    def forward(x, w_all, b_all):
        if x.ndim == 4:
            # PyTorch asserts spatial == [1, 1]; shapes are static under jit.
            assert list(x.shape[2:]) == [1, 1]
            x = x.reshape(x.shape[0], -1)
        x = x.astype(jnp.float32)

        y_all = fused_linear(x, w_all, b_all)        # (B, O_padded)
        y_all = y_all[:, :o_total]                   # drop lane padding (fused)

        # Split the fused output back into per-head dicts (fused under jit).
        scores, pose_deltas = {}, {}
        offset = 0
        for name, out_f in layer_specs:
            chunk = y_all[:, offset: offset + out_f]
            offset += out_f
            part = name.split("_")[0]
            if "cls_score" in name:
                scores[part] = chunk
            else:
                pose_deltas[part] = chunk
        return scores, pose_deltas

    return forward


class DopePredictorPallas:
    """JAX/Pallas equivalent of the PyTorch Dope_Predictor module."""

    HEADS = ("body", "hand", "face")

    def __init__(self, in_channels, dict_num_classes, dict_num_posereg, key):
        self.in_channels = in_channels
        # (name, out_features) in the same order as the PyTorch forward.
        self.layer_specs = []
        for part in self.HEADS:
            self.layer_specs.append((f"{part}_cls_score", dict_num_classes[part]))
            self.layer_specs.append((f"{part}_pose_pred", dict_num_posereg[part]))

        # Deterministic init mimicking nn.Linear's U(-1/sqrt(in), 1/sqrt(in)).
        bound = 1.0 / jnp.sqrt(jnp.float32(in_channels))
        ws, bs = [], []
        keys = jax.random.split(key, 2 * len(self.layer_specs))
        for idx, (_, out_f) in enumerate(self.layer_specs):
            kw, kb = keys[2 * idx], keys[2 * idx + 1]
            # Stored already transposed: (in, out).
            w = jax.random.uniform(kw, (in_channels, out_f), jnp.float32, -bound, bound)
            b = jax.random.uniform(kb, (out_f,), jnp.float32, -bound, bound)
            ws.append(w)
            bs.append(b)

        self.out_sizes = [out_f for _, out_f in self.layer_specs]
        self.o_total = sum(self.out_sizes)
        self.o_padded = _round_up(self.o_total, _LANE)

        w_all = jnp.concatenate(ws, axis=1)                        # (C, O_total)
        b_all = jnp.concatenate(bs, axis=0)[None, :]               # (1, O_total)
        pad_o = self.o_padded - self.o_total
        # Zero-pad the output axis to a full 128-lane tile (lane-dense stores);
        # done ONCE at init, never per forward.
        self.w_all = jnp.pad(w_all, ((0, 0), (0, pad_o)))          # (C, O_padded)
        self.b_all = jnp.pad(b_all, ((0, 0), (0, pad_o)))          # (1, O_padded)

        # Single jitted entry point for the whole forward.
        self._forward = _make_forward(tuple(self.layer_specs), self.o_total)

    def __call__(self, x):
        return self._forward(x, self.w_all, self.b_all)


if __name__ == "__main__":
    key = jax.random.PRNGKey(0)
    k_param, k_x = jax.random.split(key)

    in_channels = 32
    dict_num_classes = {"body": 2, "hand": 3, "face": 2}
    dict_num_posereg = {"body": 10, "hand": 12, "face": 6}

    model = DopePredictorPallas(in_channels, dict_num_classes, dict_num_posereg, k_param)

    # Input like PyTorch: (B, C, 1, 1) NCHW feature map from a global pool.
    x = jax.random.normal(k_x, (2, in_channels, 1, 1), jnp.float32)

    scores, pose_deltas = model(x)
    jax.block_until_ready((scores, pose_deltas))

    # Shape sanity checks against the PyTorch semantics.
    assert scores["body"].shape == (2, dict_num_classes["body"])
    assert scores["hand"].shape == (2, dict_num_classes["hand"])
    assert scores["face"].shape == (2, dict_num_classes["face"])
    assert pose_deltas["body"].shape == (2, dict_num_posereg["body"])
    assert pose_deltas["hand"].shape == (2, dict_num_posereg["hand"])
    assert pose_deltas["face"].shape == (2, dict_num_posereg["face"])

    # Numerical check against a plain-JAX reference of the same fused linear.
    x_flat = x.reshape(2, -1)
    y_ref = x_flat @ model.w_all[:, : model.o_total] + model.b_all[0, : model.o_total]
    y_ker = jnp.concatenate(
        [scores["body"], pose_deltas["body"],
         scores["hand"], pose_deltas["hand"],
         scores["face"], pose_deltas["face"]], axis=1)
    assert jnp.allclose(y_ker, y_ref, atol=1e-5, rtol=1e-5)

    print("KERNEL_OK")
</pallas_src>

<mosaic_0001>
module attributes {stable_mosaic.version = 11 : i64} {
  func.func @_fused_linear_kernel(%arg0: memref<2x32xf32, #tpu.memory_space<vmem>>, %arg1: memref<32x128xf32, #tpu.memory_space<vmem>>, %arg2: memref<1x128xf32, #tpu.memory_space<vmem>>, %arg3: memref<2x128xf32, #tpu.memory_space<vmem>>) attributes {dimension_semantics = [], scalar_prefetch = 0 : i64, scratch_operands = 0 : i64, tpu.core_type = #tpu.core_type<tc>} {
    %c0 = arith.constant 0 : index
    %c0_0 = arith.constant 0 : index
    %0 = vector.load %arg0[%c0, %c0_0] : memref<2x32xf32, #tpu.memory_space<vmem>>, vector<2x32xf32>
    %c0_1 = arith.constant 0 : index
    %c0_2 = arith.constant 0 : index
    %1 = vector.load %arg1[%c0_1, %c0_2] : memref<32x128xf32, #tpu.memory_space<vmem>>, vector<32x128xf32>
    %cst = arith.constant dense<0.000000e+00> : vector<2x128xf32>
    %2 = tpu.matmul %0, %1, %cst {dimension_numbers = #tpu.dot_dimension_numbers<[1], [0], [0], [1], [0, 0, 1, 1], [], []>} : vector<2x32xf32>, vector<32x128xf32>, vector<2x128xf32> -> vector<2x128xf32>
    %c0_3 = arith.constant 0 : index
    %c0_4 = arith.constant 0 : index
    %3 = vector.load %arg2[%c0_3, %c0_4] : memref<1x128xf32, #tpu.memory_space<vmem>>, vector<1x128xf32>
    %4 = vector.broadcast %3 : vector<1x128xf32> to vector<2x128xf32>
    %5 = arith.addf %2, %4 : vector<2x128xf32>
    %c0_5 = arith.constant 0 : index
    %c0_6 = arith.constant 0 : index
    %6 = vector.load %arg3[%c0_5, %c0_6] : memref<2x128xf32, #tpu.memory_space<vmem>>, vector<2x128xf32>
    tpu.vector_store %arg3[%c0_5, %c0_6], %5 {strides = array<i32>} : memref<2x128xf32, #tpu.memory_space<vmem>>, vector<2x128xf32>,
    return
  }
}

</mosaic_0001>

<llo_original>
// kernel: forward.1
$region0: #{forward.1}
  #allocation0 [shape = 'u32[]', space=smem, size = 0x4, offset = 0x4, fixed_abs, tag = 'smem constant byte address 0x4 - core index']
  #allocation1 [shape = 'u32[144,128]{1,0:T(1,128)}', space=vmem, size = 0x12000, scoped, tag = 'internal scratch']
  %s0 = inlined_call_operand.vmem [shape: f32[2,32], index: 0, kind: input, shape index: {}]
  %s1 = inlined_call_operand.hbm [shape: f32[32,128], index: 1, kind: input, shape index: {}]
  %s2 = inlined_call_operand.vmem [shape: f32[1,128], index: 2, kind: input, shape index: {}]
  %s3 = inlined_call_operand.vmem [shape: f32[2,128], index: 3, kind: output, shape index: {}]
  %s4 = sld [smem:[#allocation0]]
  $region26: #{forward.1} parent=0
    _
  %s6 = ssub.s32 1, %s4
  %s7 = scalar_select 0, %s6, %s4
  $region1: #{forward.1} parent=0
    #allocation2 [shape = 'u8[16384]{0}', space=vmem, size = 0x4000, scoped, tag = 'input window, operand 1, single buffered']
    #allocation3 [shape = 's32[1]{0}', space=sflag, size = 0x4, scoped, tag = 'scoped memory for forward.1']
    %8 = vsyncpa [#allocation3], 0
    // Predicated region
    $region2: #{forward.1} parent=1 // pred_check
      _
    $region3: #{forward.1} parent=1 // pred_check_branch
      %10 = sbr.rel (0) target = $region5
    $region4: #{forward.1} parent=1 // pred_region
      _
    $region5: #{forward.1} parent=1 // pred_fallthru
      _
    // Predicated region
    $region6: #{forward.1} parent=1 // pred_check
      _
    $region7: #{forward.1} parent=1 // pred_check_branch
      %12 = sbr.rel (0) target = $region9
    $region8: #{forward.1} parent=1 // pred_region
      %s14 = ssub.s32 512, 512
      %15 = vsyncadd [#allocation3], %s14
      %s16 = sshll.u32 [#allocation2], 4
      %s17 = int_to_ptr.vmem [resolvable:$true] %s16
      %22 = dma.hbm_to_vmem [thread:$0]  %s1, 512, %s17, [#allocation3], 128, 128, 8
    $region9: #{forward.1} parent=1 // pred_fallthru
      _
    // Predicated region
    $region10: #{forward.1} parent=1 // pred_check
      _
    $region11: #{forward.1} parent=1 // pred_check_branch
      %24 = sbr.rel (0) target = $region13
    $region12: #{forward.1} parent=1 // pred_region
      _
    $region13: #{forward.1} parent=1 // pred_fallthru
      _
    // Predicated region
    $region14: #{forward.1} parent=1 // pred_check
      _
    $region15: #{forward.1} parent=1 // pred_check_branch
      %26 = sbr.rel (0) target = $region17
    $region16: #{forward.1} parent=1 // pred_region
      %27 = dma.done [#allocation3], 512
    $region17: #{forward.1} parent=1 // pred_fallthru
      _
    %v28 = vld [vmem:[%s0] sm:$0x3]
    %v29 = vld [vmem:[#allocation2] sm:$0xff]
    %v30 = vld [vmem:[#allocation2 + $0x8] sm:$0xff]
    %v31 = vld [vmem:[#allocation2 + $0x10] sm:$0xff]
    %v32 = vld [vmem:[#allocation2 + $0x18] sm:$0xff]
    %v33 = vld [vmem:[%s2] sm:$0x1]
    %v35 = vlaneseq
    %v36 = vshrl.u32 %v35, 7
    %v37 = vsub.s32 0, %v36
    %v38 = vrot.slane %v33, %v37
    %vm40 = vcmask 261120
    %v42 = vsel %vm40, %v28, 0
    %44 = vmatprep.subr.mxu0 0.0
    %45 = vmatpush1.msra.mxu0 %v29
    %46 = vmatprep.subr.mxu0 0.0
    %47 = vmatpush1.msra.mxu0 %v30
    %48 = vmatprep.subr.mxu0 0.0
    %49 = vmatpush1.msra.mxu0 %v31
    %50 = vmatprep.subr.mxu0 0.0
    %51 = vmatpush1.msra.mxu0 %v32
    %52 = vmatprep.subr.mxu0 0.0
    %53 = vmatpush1.msra.mxu0 0.0
    %54 = vmatprep.subr.mxu0 0.0
    %55 = vmatpush1.msra.mxu0 0.0
    %56 = vmatprep.subr.mxu0 0.0
    %57 = vmatpush1.msra.mxu0 0.0
    %58 = vmatprep.subr.mxu0 0.0
    %59 = vmatpush1.msra.mxu0 0.0
    %60 = vmatprep.subr.mxu0 0.0
    %61 = vmatpush1.msra.mxu0 0.0
    %62 = vmatprep.subr.mxu0 0.0
    %63 = vmatpush1.msra.mxu0 0.0
    %64 = vmatprep.subr.mxu0 0.0
    %65 = vmatpush1.msra.mxu0 0.0
    %66 = vmatprep.subr.mxu0 0.0
    %67 = vmatpush1.msra.mxu0 0.0
    %68 = vmatprep.subr.mxu0 0.0
    %69 = vmatpush1.msra.mxu0 0.0
    %70 = vmatprep.subr.mxu0 0.0
    %71 = vmatpush1.msra.mxu0 0.0
    %72 = vmatprep.subr.mxu0 0.0
    %73 = vmatpush1.msra.mxu0 0.0
    %74 = vmatprep.subr.mxu0 0.0
    %75 = vmatpush1.msra.mxu0 0.0
    %76 = vmatprep.subr.mxu0 0.0
    %77 = vmatpush1.msra.mxu0 0.0
    %78 = vmatprep.subr.mxu0 0.0
    %79 = vmatpush1.msra.mxu0 0.0
    %80 = vmatprep.subr.mxu0 0.0
    %81 = vmatpush1.msra.mxu0 0.0
    %82 = vmatprep.subr.mxu0 0.0
    %83 = vmatpush1.msra.mxu0 0.0
    %84 = vmatprep.subr.mxu0 0.0
    %85 = vmatpush1.msra.mxu0 0.0
    %86 = vmatprep.subr.mxu0 0.0
    %87 = vmatpush1.msra.mxu0 0.0
    %88 = vmatprep.subr.mxu0 0.0
    %89 = vmatpush1.msra.mxu0 0.0
    %90 = vmatprep.subr.mxu0 0.0
    %91 = vmatpush1.msra.mxu0 0.0
    %92 = vmatprep.subr.mxu0 0.0
    %93 = vmatpush1.msra.mxu0 0.0
    %94 = vmatprep.subr.mxu0 0.0
    %95 = vmatpush1.msra.mxu0 0.0
    %96 = vmatprep.subr.mxu0 0.0
    %97 = vmatpush1.msra.mxu0 0.0
    %98 = vmatprep.subr.mxu0 0.0
    %99 = vmatpush1.msra.mxu0 0.0
    %100 = vmatprep.subr.mxu0 0.0
    %101 = vmatpush1.msra.mxu0 0.0
    %102 = vmatprep.subr.mxu0 0.0
    %103 = vmatpush1.msra.mxu0 0.0
    %104 = vmatprep.subr.mxu0 0.0
    %105 = vmatpush1.msra.mxu0 0.0
    %106 = vmatprep.subr.mxu0 0.0
    %107 = vmatpush1.msra.mxu0 0.0
    %108 = vmatprep.mubr.f32.mxu0 0.0
    %109 = vmatmul.mubr.f32.gmra.mrb[0].mxu0 %v42
    %v110 = vpop.f32.mrb[0].mxu0
    %v111 = vadd.f32 %v38, %v110
    %v112 = vpop.f32.mrb[0].mxu0
    %113 = vdwg.mxu0
    %114 = vst [vmem:[%s3] sm:$0x3] %v111
    // Predicated region
    $region18: #{forward.1} parent=1 // pred_check
      _
    $region19: #{forward.1} parent=1 // pred_check_branch
      %116 = sbr.rel (0) target = $region21
    $region20: #{forward.1} parent=1 // pred_region
      _
    $region21: #{forward.1} parent=1 // pred_fallthru
      _
    // Predicated region
    $region22: #{forward.1} parent=1 // pred_check
      _
    $region23: #{forward.1} parent=1 // pred_check_branch
      %118 = sbr.rel (0) target = $region25
    $region24: #{forward.1} parent=1 // pred_region
      _
    $region25: #{forward.1} parent=1 // pred_fallthru
      _
    %119 = vsyncpa [#allocation3], 1

</llo_original>
